<compile_context>
chip_gen: v7x
topology: tpu7x:2x2x1
jax: 0.10.0
libtpu: 0.0.40
codegen_flags: <defaults>
</compile_context>

<pallas_src>
import functools
import math

import jax
import jax.numpy as jnp
from jax.experimental import pallas as pl
from jax.experimental.pallas import tpu as pltpu


# ---------------------------------------------------------------------------
# Config (mirrors the relevant VLMConfig fields)
# ---------------------------------------------------------------------------
VIT_HIDDEN_DIM = 32
MP_PIXEL_SHUFFLE_FACTOR = 2
LM_HIDDEN_DIM = 64

INPUT_DIM = VIT_HIDDEN_DIM * MP_PIXEL_SHUFFLE_FACTOR ** 2   # 128
OUTPUT_DIM = LM_HIDDEN_DIM                                   # 64


def _round_up(x, m):
    return ((x + m - 1) // m) * m


# ---------------------------------------------------------------------------
# Fused pixel-shuffle + projection kernel
# ---------------------------------------------------------------------------
def _mp_kernel(x_ref, w_ref, o_ref, *, sf, dj):
    """One row-tile of the fused pixel-shuffle + linear projection.

    x_ref: (tr, sf, w_out, dj)   raw ViT activations; one leading row = the
                                 w_out output tokens of one (batch, h1) group,
                                 dj = sf * vit_hidden_dim.
    w_ref: (sf, dj, dout)        projection weight grouped by h2, VMEM-resident.
    o_ref: (tr * w_out, dout)    projected output tokens for this tile.
    """
    acc = None
    for h2 in range(sf):
        # Leading-dim index (cheap view) + collapse to 2-D for one large-M
        # MXU matmul per h2.  The collapse is layout-preserving whenever
        # w_out is a multiple of the sublane tile.
        lhs = x_ref[:, h2, :, :].reshape(-1, dj)            # (tr*w_out, dj)
        part = jnp.dot(lhs, w_ref[h2],                      # (tr*w_out, dout)
                       preferred_element_type=jnp.float32)
        acc = part if acc is None else acc + part
    o_ref[...] = acc.astype(o_ref.dtype)


# ---------------------------------------------------------------------------
# MP forward
# ---------------------------------------------------------------------------
def mp_forward(x: jax.Array, proj_weight_t: jax.Array,
               *, scale_factor: int = MP_PIXEL_SHUFFLE_FACTOR,
               target_step_bytes: int = 8 * 1024 * 1024,
               rows_per_step=None) -> jax.Array:
    """
    x:             [B, N, D]  ViT tokens (N a perfect square, divisible by sf^2)
    proj_weight_t: [input_dim, output_dim]  (pre-transposed once at setup;
                   torch keeps nn.Linear weight as (output_dim, input_dim))
    returns:       [B, N / sf^2, output_dim]
    """
    B, N, D = x.shape
    sf = scale_factor
    seq_root = math.isqrt(N)
    assert seq_root * seq_root == N, "seq_len must be a perfect square"
    assert seq_root % sf == 0, "seq_root must be divisible by scale_factor"
    h_out = w_out = seq_root // sf

    dj = sf * D                       # per-h2 chunk of shuffled channels
    din = sf * sf * D                 # shuffled channel count (linear input)
    din_w, dout = proj_weight_t.shape
    assert din_w == din, "projection weight must be (input_dim, output_dim)"

    R = B * h_out                     # one row = the w_out tokens of (b, h1)
    lx = sf * w_out * dj              # input elements per row
    lo = w_out * dout                 # output elements per row

    # Free, contiguous views (the shuffle itself happens inside the kernel).
    x4 = x.reshape(R, sf, w_out, dj)
    w3 = proj_weight_t.reshape(sf, dj, dout)

    # ----- row-tile size ----------------------------------------------------
    itemsize = jnp.dtype(x.dtype).itemsize
    sub = 16 if itemsize == 2 else 8                 # sublane packing of dtype
    align = sub // math.gcd(w_out, sub)              # makes (tr*w_out) % sub == 0
    if rows_per_step is not None:
        tr = int(rows_per_step)                      # caller-supplied (tests)
    else:
        bytes_per_row = (lx + lo) * itemsize
        tr = max(1, target_step_bytes // max(1, bytes_per_row))
        # Keep >= ~4 grid steps (2 per v7x TensorCore) whenever possible so the
        # "parallel" axis can be sharded and the pipeline has work to overlap.
        tr = min(tr, max(1, R // 4))
        tr = max(align, (tr // align) * align)
    tr = min(tr, R)
    grid = (pl.cdiv(R, tr),)

    # ----- VMEM budget (only set explicitly when it matters) ----------------
    def _block_bytes(shape):
        s = list(shape)
        s[-1] = _round_up(s[-1], 128)
        s[-2] = _round_up(s[-2], sub)
        n = 1
        for v in s:
            n *= v
        return n * itemsize

    vmem_need = (2 * _block_bytes((tr, sf, w_out, dj))     # double-buffered in
                 + 2 * _block_bytes((tr * w_out, dout))    # double-buffered out
                 + _block_bytes((sf, dj, dout)))           # resident weight
    compiler_kwargs = dict(dimension_semantics=("parallel",))
    if vmem_need > 12 * 1024 * 1024:
        compiler_kwargs["vmem_limit_bytes"] = int(
            min(2 * vmem_need, 48 * 1024 * 1024))

    flops = 2 * R * w_out * din * dout
    bytes_accessed = (x4.size + w3.size + R * lo) * itemsize

    out2 = pl.pallas_call(
        functools.partial(_mp_kernel, sf=sf, dj=dj),
        out_shape=jax.ShapeDtypeStruct((R * w_out, dout), x.dtype),
        grid_spec=pltpu.PrefetchScalarGridSpec(
            num_scalar_prefetch=0,
            grid=grid,
            in_specs=[
                # Contiguous row tile of raw tokens; auto double-buffered.
                pl.BlockSpec((tr, sf, w_out, dj), lambda i: (i, 0, 0, 0)),
                # Split projection weight: constant index -> VMEM-resident.
                pl.BlockSpec((sf, dj, dout), lambda i: (0, 0, 0)),
            ],
            out_specs=pl.BlockSpec((tr * w_out, dout), lambda i: (i, 0)),
        ),
        compiler_params=pltpu.CompilerParams(**compiler_kwargs),
        cost_estimate=pl.CostEstimate(
            flops=flops, transcendentals=0, bytes_accessed=bytes_accessed),
    )(x4, w3)

    # Free reshape back to [B, N', output_dim].
    return out2.reshape(B, h_out * w_out, dout)


# ---------------------------------------------------------------------------
# Pure-JAX reference (torch MP.forward semantics) for correctness checks
# ---------------------------------------------------------------------------
def _pixel_shuffle_ref(x: jax.Array, sf: int) -> jax.Array:
    bsz, seq_len, emb = x.shape
    r = math.isqrt(seq_len)
    xr = x.reshape(bsz, r, r, emb)
    xr = xr.reshape(bsz, r // sf, sf, r // sf, sf, emb)
    xr = jnp.transpose(xr, (0, 1, 3, 2, 4, 5))
    return xr.reshape(bsz, (r // sf) * (r // sf), -1)


# ---------------------------------------------------------------------------
# Main
# ---------------------------------------------------------------------------
if __name__ == "__main__":
    key = jax.random.PRNGKey(0)
    k_x1, k_x2, k_w = jax.random.split(key, 3)

    # Deterministic init matching nn.init.normal_(std=0.02), bias-free.
    proj_weight = 0.02 * jax.random.normal(
        k_w, (OUTPUT_DIM, INPUT_DIM), dtype=jnp.float32)   # torch (out, in)
    # Review: hoist the transpose out of the per-call path (done once here).
    proj_weight_t = jnp.transpose(proj_weight)             # (in, out)

    fwd = jax.jit(mp_forward,
                  static_argnames=("scale_factor", "target_step_bytes",
                                   "rows_per_step"))

    def _check(x, wt, *, atol, rtol, **kw):
        out = fwd(x, wt, **kw)
        jax.block_until_ready(out)
        ref = _pixel_shuffle_ref(
            x.astype(jnp.float32), MP_PIXEL_SHUFFLE_FACTOR) @ wt.astype(jnp.float32)
        b, n, _ = x.shape
        n_out = n // MP_PIXEL_SHUFFLE_FACTOR ** 2
        assert out.shape == (b, n_out, wt.shape[1]), out.shape
        o32 = out.astype(jnp.float32)
        err = float(jnp.max(jnp.abs(o32 - ref)))
        assert jnp.allclose(o32, ref, atol=atol, rtol=rtol), err
        return out

    # 1) Main case: B=2, 16x16 token grid, D=32 (w_out=8 -> layout-preserving
    #    LHS collapse, 4 pipelined grid steps).
    x1 = jax.random.normal(k_x1, (2, 256, VIT_HIDDEN_DIM), dtype=jnp.float32)
    _check(x1, proj_weight_t, atol=1e-4, rtol=1e-4)

    # 2) Non-divisible R (R=24, 7 rows/step -> partial last tile masked on
    #    writeback), exercising the padded-tail path.
    x2 = jax.random.normal(k_x2, (3, 256, VIT_HIDDEN_DIM), dtype=jnp.float32)
    _check(x2, proj_weight_t, atol=1e-4, rtol=1e-4, rows_per_step=7)

    # 3) bf16 I/O (halves HBM traffic; accumulation stays f32): 32x32 grid.
    x3 = jax.random.normal(k_x1, (1, 1024, VIT_HIDDEN_DIM), dtype=jnp.bfloat16)
    _check(x3, proj_weight_t.astype(jnp.bfloat16), atol=1e-2, rtol=5e-2)

    print("KERNEL_OK")
</pallas_src>

<mosaic_0001>
module attributes {stable_mosaic.version = 11 : i64} {
  func.func @_mp_kernel(%arg0: i32, %arg1: memref<4x2x8x64xf32, #tpu.memory_space<vmem>>, %arg2: memref<2x64x64xf32, #tpu.memory_space<vmem>>, %arg3: memref<32x64xf32, #tpu.memory_space<vmem>>) attributes {dimension_semantics = [#tpu.dimension_semantics<parallel>], iteration_bounds = array<i64: 4>, scalar_prefetch = 0 : i64, scratch_operands = 0 : i64, tpu.core_type = #tpu.core_type<tc>, window_params = [{transform_indices = @transform_0, window_bounds = array<i64: 4, 2, 8, 64>}, {pipeline_mode = #tpu.pipeline_mode<synchronous>, transform_indices = @transform_1, window_bounds = array<i64: 2, 64, 64>}, {transform_indices = @transform_2, window_bounds = array<i64: 32, 64>}]} {
    %c0 = arith.constant 0 : index
    %c0_0 = arith.constant 0 : index
    %c0_1 = arith.constant 0 : index
    %c0_2 = arith.constant 0 : index
    %0 = vector.load %arg1[%c0, %c0_0, %c0_1, %c0_2] : memref<4x2x8x64xf32, #tpu.memory_space<vmem>>, vector<4x1x8x64xf32>
    %1 = vector.shape_cast %0 : vector<4x1x8x64xf32> to vector<4x8x64xf32>
    %2 = vector.shape_cast %1 : vector<4x8x64xf32> to vector<32x64xf32>
    %c0_3 = arith.constant 0 : index
    %c0_4 = arith.constant 0 : index
    %c0_5 = arith.constant 0 : index
    %3 = vector.load %arg2[%c0_3, %c0_4, %c0_5] : memref<2x64x64xf32, #tpu.memory_space<vmem>>, vector<1x64x64xf32>
    %4 = vector.shape_cast %3 : vector<1x64x64xf32> to vector<64x64xf32>
    %cst = arith.constant dense<0.000000e+00> : vector<32x64xf32>
    %5 = tpu.matmul %2, %4, %cst {dimension_numbers = #tpu.dot_dimension_numbers<[1], [0], [0], [1], [0, 0, 1, 1], [], []>} : vector<32x64xf32>, vector<64x64xf32>, vector<32x64xf32> -> vector<32x64xf32>
    %c0_6 = arith.constant 0 : index
    %c1 = arith.constant 1 : index
    %c0_7 = arith.constant 0 : index
    %c0_8 = arith.constant 0 : index
    %6 = vector.load %arg1[%c0_6, %c1, %c0_7, %c0_8] : memref<4x2x8x64xf32, #tpu.memory_space<vmem>>, vector<4x1x8x64xf32>
    %7 = vector.shape_cast %6 : vector<4x1x8x64xf32> to vector<4x8x64xf32>
    %8 = vector.shape_cast %7 : vector<4x8x64xf32> to vector<32x64xf32>
    %c1_9 = arith.constant 1 : index
    %c0_10 = arith.constant 0 : index
    %c0_11 = arith.constant 0 : index
    %9 = vector.load %arg2[%c1_9, %c0_10, %c0_11] : memref<2x64x64xf32, #tpu.memory_space<vmem>>, vector<1x64x64xf32>
    %10 = vector.shape_cast %9 : vector<1x64x64xf32> to vector<64x64xf32>
    %cst_12 = arith.constant dense<0.000000e+00> : vector<32x64xf32>
    %11 = tpu.matmul %8, %10, %cst_12 {dimension_numbers = #tpu.dot_dimension_numbers<[1], [0], [0], [1], [0, 0, 1, 1], [], []>} : vector<32x64xf32>, vector<64x64xf32>, vector<32x64xf32> -> vector<32x64xf32>
    %12 = arith.addf %5, %11 : vector<32x64xf32>
    %c0_13 = arith.constant 0 : index
    %c0_14 = arith.constant 0 : index
    %13 = vector.load %arg3[%c0_13, %c0_14] : memref<32x64xf32, #tpu.memory_space<vmem>>, vector<32x64xf32>
    tpu.vector_store %arg3[%c0_13, %c0_14], %12 {strides = array<i32>} : memref<32x64xf32, #tpu.memory_space<vmem>>, vector<32x64xf32>,
    return
  }
  func.func @transform_0(%arg0: i32) -> (i32, i32, i32, i32) {
    %c0_i32 = arith.constant 0 : i32
    %c0_i32_0 = arith.constant 0 : i32
    %c0_i32_1 = arith.constant 0 : i32
    %c0_i32_2 = arith.constant 0 : i32
    return %arg0, %c0_i32, %c0_i32_0, %c0_i32_1 : i32, i32, i32, i32
  }
  func.func @transform_1(%arg0: i32) -> (i32, i32, i32) {
    %c0_i32 = arith.constant 0 : i32
    %c0_i32_0 = arith.constant 0 : i32
    %c0_i32_1 = arith.constant 0 : i32
    %c0_i32_2 = arith.constant 0 : i32
    return %c0_i32, %c0_i32_0, %c0_i32_1 : i32, i32, i32
  }
  func.func @transform_2(%arg0: i32) -> (i32, i32) {
    %c0_i32 = arith.constant 0 : i32
    %c0_i32_0 = arith.constant 0 : i32
    return %arg0, %c0_i32 : i32, i32
  }
}

</mosaic_0001>

<llo_original>
// kernel: mp_forward.1
$region0: #{mp_forward.1}
  #allocation0 [shape = 'u32[]', space=smem, size = 0x4, offset = 0x4, fixed_abs, tag = 'smem constant byte address 0x4 - core index']
  #allocation1 [shape = 'u32[144,128]{1,0:T(1,128)}', space=vmem, size = 0x12000, scoped, tag = 'internal scratch']
  %s0 = inlined_call_operand.vmem [shape: f32[16,2,8,64], index: 0, kind: input, shape index: {}]
  %s1 = inlined_call_operand.vmem [shape: f32[2,64,64], index: 1, kind: input, shape index: {}]
  %s2 = inlined_call_operand.hbm [shape: f32[128,64], index: 2, kind: output, shape index: {}]
  %s3 = sld [smem:[#allocation0]]
  $region41: #{mp_forward.1} parent=0
    _
  %s5 = ssub.s32 1, %s3
  %s6 = scalar_select 0, %s5, %s3
  $region1: #{mp_forward.1} parent=0
    #allocation2 [shape = 'u8[32768]{0}', space=vmem, size = 0x8000, scoped, tag = 'output window, operand 0']
    #allocation3 [shape = 's32[2]{0}', space=sflag, size = 0x8, scoped, tag = 'scoped memory for mp_forward.1']
    %7 = vsyncpa [#allocation3], 0
    %s8 = scalar_lea.sflag [#allocation3], 1
    %9 = vsyncpa %s8, 0
    loop: start=0, step=1, limit=6
    $region2: #{mp_forward.1} parent=1 // loop_pre_header
      _
    $region3: #{mp_forward.1} parent=1 // loop_header
      %s11 = sphi 0, %s15
      %p12 = scmp.ge.s32.totalorder %s11, 6
      %s21 = sphi 0, %s23
      %s24 = sphi 0, %s21
      %s25 = sphi 0, %s24
      %s41 = sphi 0, %s25
      %s45 = sphi 0, %s45
      %s47 = sphi 0, %s45
      %s48 = sphi 0, %s47
      %s62 = sphi 0, %s48
      %s68 = sphi 0, %s70
      %s71 = sphi 0, %s68
      %s72 = sphi 0, %s71
      %s88 = sphi 0, %s72
    $region4: #{mp_forward.1} parent=1 // loop_header_branch
      %14 = sbr.rel (%p12) target = $region8
    $region5: #{mp_forward.1} parent=1 // loop_body
      %s16 = ssub.s32 %s11, 1
      %s17 = ssub.s32 %s11, 2
      %s18 = sadd.s32 %s11, 1
      %s19 = ssub.s32 %s11, %s18
      %p20 = scmp.eq.s32.totalorder %s19, 0
      %s22 = sadd.s32 %s21, 1
      %s23 = scalar_select %p20, %s21, %s22
      %p26 = pneg %p20
      %p27 = scmp.eq.s32.totalorder %s11, 3
      %p28 = por %p26, %p27
      %p29 = scmp.ne.s32.totalorder %s21, %s24
      %p30 = scmp.eq.s32.totalorder %s11, 0
      %p31 = por %p29, %p30
      %p32 = scmp.ne.s32.totalorder %s21, %s24
      %p33 = scmp.eq.s32.totalorder %s16, 3
      %p34 = por %p32, %p33
      %p35 = scmp.ne.s32.totalorder %s24, %s25
      %p36 = scmp.eq.s32.totalorder %s16, 0
      %p37 = por %p35, %p36
      %p38 = scmp.ne.s32.totalorder %s24, %s25
      %p39 = scmp.eq.s32.totalorder %s17, 3
      %p40 = por %p38, %p39
      %p42 = scmp.ne.s32.totalorder %s25, %s41
      %p43 = scmp.eq.s32.totalorder %s17, 0
      %p44 = por %p42, %p43
      %s46 = sadd.s32 %s45, 1
      %p49 = scmp.eq.s32.totalorder %s11, 3
      %p50 = scmp.ne.s32.totalorder %s45, %s47
      %p51 = scmp.eq.s32.totalorder %s11, 0
      %p52 = por %p50, %p51
      %p53 = scmp.ne.s32.totalorder %s45, %s47
      %p54 = scmp.eq.s32.totalorder %s16, 3
      %p55 = por %p53, %p54
      %p56 = scmp.ne.s32.totalorder %s47, %s48
      %p57 = scmp.eq.s32.totalorder %s16, 0
      %p58 = por %p56, %p57
      %p59 = scmp.ne.s32.totalorder %s47, %s48
      %p60 = scmp.eq.s32.totalorder %s17, 3
      %p61 = por %p59, %p60
      %p63 = scmp.ne.s32.totalorder %s48, %s62
      %p64 = scmp.eq.s32.totalorder %s17, 0
      %p65 = por %p63, %p64
      %s66 = ssub.s32 %s11, %s18
      %p67 = scmp.eq.s32.totalorder %s66, 0
      %s69 = sadd.s32 %s68, 1
      %s70 = scalar_select %p67, %s68, %s69
      %p73 = pneg %p67
      %p74 = scmp.eq.s32.totalorder %s11, 3
      %p75 = por %p73, %p74
      %p76 = scmp.ne.s32.totalorder %s68, %s71
      %p77 = scmp.eq.s32.totalorder %s11, 0
      %p78 = por %p76, %p77
      %p79 = scmp.ne.s32.totalorder %s68, %s71
      %p80 = scmp.eq.s32.totalorder %s16, 3
      %p81 = por %p79, %p80
      %p82 = scmp.ne.s32.totalorder %s71, %s72
      %p83 = scmp.eq.s32.totalorder %s16, 0
      %p84 = por %p82, %p83
      %p85 = scmp.ne.s32.totalorder %s71, %s72
      %p86 = scmp.eq.s32.totalorder %s17, 3
      %p87 = por %p85, %p86
      %p89 = scmp.ne.s32.totalorder %s72, %s88
      %p90 = scmp.eq.s32.totalorder %s17, 0
      %p91 = por %p89, %p90
      %p92 = scmp.le.s32.totalorder 1, %s11
      %p93 = scmp.lt.s32.totalorder %s11, 5
      %p94 = pnand %p92, %p93
      %p95 = pneg %p94
      // Predicated region
      $region9: #{mp_forward.1} parent=5 // pred_check
        _
      $region10: #{mp_forward.1} parent=5 // pred_check_branch
        %97 = sbr.rel (%p94) target = $region12
      $region11: #{mp_forward.1} parent=5 // pred_region
        %s98 = ssub.s32 %s11, 1
        // Predicated region
        $region13: #{mp_forward.1} parent=11 // pred_check
          %p99 = pneg %p58
        $region14: #{mp_forward.1} parent=11 // pred_check_branch
          %101 = sbr.rel (%p99) target = $region16
        $region15: #{mp_forward.1} parent=11 // pred_region
          _
        $region16: #{mp_forward.1} parent=11 // pred_fallthru
          _
      $region12: #{mp_forward.1} parent=5 // pred_fallthru
        _
      %p102 = scmp.lt.s32.totalorder %s11, 4
      // Predicated region
      $region17: #{mp_forward.1} parent=5 // pred_check
        %p103 = pneg %p102
      $region18: #{mp_forward.1} parent=5 // pred_check_branch
        %105 = sbr.rel (%p103) target = $region20
      $region19: #{mp_forward.1} parent=5 // pred_region
        // Predicated region
        $region21: #{mp_forward.1} parent=19 // pred_check
          %p106 = pneg %p31
        $region22: #{mp_forward.1} parent=19 // pred_check_branch
          %108 = sbr.rel (%p106) target = $region24
        $region23: #{mp_forward.1} parent=19 // pred_region
          %s109 = smul.u32 4, %s11
          %p110 = scmp.lt.s32.totalorder %s109, 15
          %s111 = scalar_select %p110, %s109, 15
          %s112 = smul.addr %s111, 2
          %s113 = smul.addr %s112, 8
          %s114 = scalar_lea.vmem %s0, %s113
          %s115 = smul.u32 4, %s11
        $region24: #{mp_forward.1} parent=19 // pred_fallthru
          _
      $region20: #{mp_forward.1} parent=5 // pred_fallthru
        _
      %p116 = scmp.le.s32.totalorder 1, %s11
      %p117 = scmp.lt.s32.totalorder %s11, 5
      %p118 = pnand %p116, %p117
      %p119 = pneg %p118
      // Predicated region
      $region25: #{mp_forward.1} parent=5 // pred_check
        _
      $region26: #{mp_forward.1} parent=5 // pred_check_branch
        %121 = sbr.rel (%p118) target = $region28
      $region27: #{mp_forward.1} parent=5 // pred_region
        %s122 = ssub.s32 %s11, 1
        %s123 = smul.u32 4, %s16
        %p124 = scmp.lt.s32.totalorder %s123, 15
        %s125 = scalar_select %p124, %s123, 15
        %s126 = smul.addr %s125, 2
        %s127 = smul.addr %s126, 8
        %s128 = scalar_lea.vmem %s0, %s127
        %p129 = pneg %p37
        %p130 = pneg %p34
        %p131 = pneg %p58
        %p132 = pneg %p55
        %p133 = pneg %p84
        %p134 = pneg %p81
        %s135 = sand.u32 %s71, 1
        %s136 = scalar_lea.sflag [#allocation3], %s135
        %s137 = sand.u32 %s71, 1
        %s138 = smul.addr %s137, 32
        %s139 = scalar_lea.vmem [#allocation2], %s138
        %s140 = smul.u32 4, %s16
        %p141 = scmp.lt.s32.totalorder %s140, 15
        %s142 = scalar_select %p141, %s140, 15
        %s143 = smul.addr %s142, 2
        %s144 = smul.addr %s143, 8
        %s145 = scalar_lea.vmem %s0, %s144
        %s146 = smul.u32 4, %s16
        %s147 = smul.u32 4, %s16
        %v148 = vld [vmem:[%s145] sm:$0xff]
        %v149 = vld [vmem:[%s145 + $0x10] sm:$0xff]
        %v150 = vld [vmem:[%s145 + $0x20] sm:$0xff]
        %v151 = vld [vmem:[%s145 + $0x30] sm:$0xff]
        %v152 = vld [vmem:[%s1] sm:$0xff]
        %v153 = vld [vmem:[%s1 + $0x8] sm:$0xff]
        %v154 = vld [vmem:[%s1 + $0x10] sm:$0xff]
        %v155 = vld [vmem:[%s1 + $0x18] sm:$0xff]
        %v156 = vld [vmem:[%s1 + $0x20] sm:$0xff]
        %v157 = vld [vmem:[%s1 + $0x28] sm:$0xff]
        %v158 = vld [vmem:[%s1 + $0x30] sm:$0xff]
        %v159 = vld [vmem:[%s1 + $0x38] sm:$0xff]
        %s160 = scalar_lea.vmem %s145, 8
        %v161 = vld [vmem:[%s160] sm:$0xff]
        %v162 = vld [vmem:[%s160 + $0x10] sm:$0xff]
        %v163 = vld [vmem:[%s160 + $0x20] sm:$0xff]
        %v164 = vld [vmem:[%s160 + $0x30] sm:$0xff]
        %s165 = scalar_lea.vmem %s1, 64
        %v166 = vld [vmem:[%s165] sm:$0xff]
        %v167 = vld [vmem:[%s165 + $0x8] sm:$0xff]
        %v168 = vld [vmem:[%s165 + $0x10] sm:$0xff]
        %v169 = vld [vmem:[%s165 + $0x18] sm:$0xff]
        %v170 = vld [vmem:[%s165 + $0x20] sm:$0xff]
        %v171 = vld [vmem:[%s165 + $0x28] sm:$0xff]
        %v172 = vld [vmem:[%s165 + $0x30] sm:$0xff]
        %v173 = vld [vmem:[%s165 + $0x38] sm:$0xff]
        %vm174 = vcmask 523264
        %v176 = vsel %vm174, %v161, 0
        %v179 = vsel %vm174, %v162, 0
        %v182 = vsel %vm174, %v163, 0
        %v185 = vsel %vm174, %v164, 0
        %187 = vmatprep.subr.mxu0 0.0
        %188 = vmatpush1.msra.mxu0 %v166
        %189 = vmatprep.subr.mxu0 0.0
        %190 = vmatpush1.msra.mxu0 %v167
        %191 = vmatprep.subr.mxu0 0.0
        %192 = vmatpush1.msra.mxu0 %v168
        %193 = vmatprep.subr.mxu0 0.0
        %194 = vmatpush1.msra.mxu0 %v169
        %195 = vmatprep.subr.mxu0 0.0
        %196 = vmatpush1.msra.mxu0 %v170
        %197 = vmatprep.subr.mxu0 0.0
        %198 = vmatpush1.msra.mxu0 %v171
        %199 = vmatprep.subr.mxu0 0.0
        %200 = vmatpush1.msra.mxu0 %v172
        %201 = vmatprep.subr.mxu0 0.0
        %202 = vmatpush1.msra.mxu0 %v173
        %203 = vmatprep.subr.mxu0 0.0
        %204 = vmatpush1.msra.mxu0 0.0
        %205 = vmatprep.subr.mxu0 0.0
        %206 = vmatpush1.msra.mxu0 0.0
        %207 = vmatprep.subr.mxu0 0.0
        %208 = vmatpush1.msra.mxu0 0.0
        %209 = vmatprep.subr.mxu0 0.0
        %210 = vmatpush1.msra.mxu0 0.0
        %211 = vmatprep.subr.mxu0 0.0
        %212 = vmatpush1.msra.mxu0 0.0
        %213 = vmatprep.subr.mxu0 0.0
        %214 = vmatpush1.msra.mxu0 0.0
        %215 = vmatprep.subr.mxu0 0.0
        %216 = vmatpush1.msra.mxu0 0.0
        %217 = vmatprep.subr.mxu0 0.0
        %218 = vmatpush1.msra.mxu0 0.0
        %219 = vmatprep.subr.mxu0 0.0
        %220 = vmatpush1.msra.mxu0 0.0
        %221 = vmatprep.subr.mxu0 0.0
        %222 = vmatpush1.msra.mxu0 0.0
        %223 = vmatprep.subr.mxu0 0.0
        %224 = vmatpush1.msra.mxu0 0.0
        %225 = vmatprep.subr.mxu0 0.0
        %226 = vmatpush1.msra.mxu0 0.0
        %227 = vmatprep.subr.mxu0 0.0
        %228 = vmatpush1.msra.mxu0 0.0
        %229 = vmatprep.subr.mxu0 0.0
        %230 = vmatpush1.msra.mxu0 0.0
        %231 = vmatprep.subr.mxu0 0.0
        %232 = vmatpush1.msra.mxu0 0.0
        %233 = vmatprep.subr.mxu0 0.0
        %234 = vmatpush1.msra.mxu0 0.0
        %235 = vmatprep.subr.mxu0 0.0
        %236 = vmatpush1.msra.mxu0 0.0
        %237 = vmatprep.subr.mxu0 0.0
        %238 = vmatpush1.msra.mxu0 0.0
        %239 = vmatprep.subr.mxu0 0.0
        %240 = vmatpush1.msra.mxu0 0.0
        %241 = vmatprep.subr.mxu0 0.0
        %242 = vmatpush1.msra.mxu0 0.0
        %243 = vmatprep.subr.mxu0 0.0
        %244 = vmatpush1.msra.mxu0 0.0
        %245 = vmatprep.subr.mxu0 0.0
        %246 = vmatpush1.msra.mxu0 0.0
        %247 = vmatprep.subr.mxu0 0.0
        %248 = vmatpush1.msra.mxu0 0.0
        %249 = vmatprep.subr.mxu0 0.0
        %250 = vmatpush1.msra.mxu0 0.0
        %251 = vmatprep.mubr.f32.mxu0 0.0
        %252 = vmatmul.mubr.f32.gmra.mrb[0].mxu0 %v176
        %v253 = vpop.f32.mrb[0].mxu0
        %v254 = vadd.f32 0.0, %v253
        %v255 = vpop.f32.mrb[0].mxu0
        %256 = vmatprep.mubr.f32.mxu0 0.0
        %257 = vmatmul.mubr.f32.gmra.mrb[0].mxu0 %v179
        %v258 = vpop.f32.mrb[0].mxu0
        %v259 = vadd.f32 0.0, %v258
        %v260 = vpop.f32.mrb[0].mxu0
        %261 = vmatprep.mubr.f32.mxu0 0.0
        %262 = vmatmul.mubr.f32.gmra.mrb[0].mxu0 %v182
        %v263 = vpop.f32.mrb[0].mxu0
        %v264 = vadd.f32 0.0, %v263
        %v265 = vpop.f32.mrb[0].mxu0
        %266 = vmatprep.mubr.f32.mxu0 0.0
        %267 = vmatmul.mubr.f32.gmra.mrb[0].mxu0 %v185
        %v268 = vpop.f32.mrb[0].mxu0
        %v269 = vadd.f32 0.0, %v268
        %v270 = vpop.f32.mrb[0].mxu0
        %271 = vdwg.mxu0
        %v273 = vsel %vm174, %v148, 0
        %v276 = vsel %vm174, %v149, 0
        %v279 = vsel %vm174, %v150, 0
        %v282 = vsel %vm174, %v151, 0
        %284 = vmatprep.subr.mxu0 0.0
        %285 = vmatpush1.msra.mxu0 %v152
        %286 = vmatprep.subr.mxu0 0.0
        %287 = vmatpush1.msra.mxu0 %v153
        %288 = vmatprep.subr.mxu0 0.0
        %289 = vmatpush1.msra.mxu0 %v154
        %290 = vmatprep.subr.mxu0 0.0
        %291 = vmatpush1.msra.mxu0 %v155
        %292 = vmatprep.subr.mxu0 0.0
        %293 = vmatpush1.msra.mxu0 %v156
        %294 = vmatprep.subr.mxu0 0.0
        %295 = vmatpush1.msra.mxu0 %v157
        %296 = vmatprep.subr.mxu0 0.0
        %297 = vmatpush1.msra.mxu0 %v158
        %298 = vmatprep.subr.mxu0 0.0
        %299 = vmatpush1.msra.mxu0 %v159
        %300 = vmatprep.subr.mxu0 0.0
        %301 = vmatpush1.msra.mxu0 0.0
        %302 = vmatprep.subr.mxu0 0.0
        %303 = vmatpush1.msra.mxu0 0.0
        %304 = vmatprep.subr.mxu0 0.0
        %305 = vmatpush1.msra.mxu0 0.0
        %306 = vmatprep.subr.mxu0 0.0
        %307 = vmatpush1.msra.mxu0 0.0
        %308 = vmatprep.subr.mxu0 0.0
        %309 = vmatpush1.msra.mxu0 0.0
        %310 = vmatprep.subr.mxu0 0.0
        %311 = vmatpush1.msra.mxu0 0.0
        %312 = vmatprep.subr.mxu0 0.0
        %313 = vmatpush1.msra.mxu0 0.0
        %314 = vmatprep.subr.mxu0 0.0
        %315 = vmatpush1.msra.mxu0 0.0
        %316 = vmatprep.subr.mxu0 0.0
        %317 = vmatpush1.msra.mxu0 0.0
        %318 = vmatprep.subr.mxu0 0.0
        %319 = vmatpush1.msra.mxu0 0.0
        %320 = vmatprep.subr.mxu0 0.0
        %321 = vmatpush1.msra.mxu0 0.0
        %322 = vmatprep.subr.mxu0 0.0
        %323 = vmatpush1.msra.mxu0 0.0
        %324 = vmatprep.subr.mxu0 0.0
        %325 = vmatpush1.msra.mxu0 0.0
        %326 = vmatprep.subr.mxu0 0.0
        %327 = vmatpush1.msra.mxu0 0.0
        %328 = vmatprep.subr.mxu0 0.0
        %329 = vmatpush1.msra.mxu0 0.0
        %330 = vmatprep.subr.mxu0 0.0
        %331 = vmatpush1.msra.mxu0 0.0
        %332 = vmatprep.subr.mxu0 0.0
        %333 = vmatpush1.msra.mxu0 0.0
        %334 = vmatprep.subr.mxu0 0.0
        %335 = vmatpush1.msra.mxu0 0.0
        %336 = vmatprep.subr.mxu0 0.0
        %337 = vmatpush1.msra.mxu0 0.0
        %338 = vmatprep.subr.mxu0 0.0
        %339 = vmatpush1.msra.mxu0 0.0
        %340 = vmatprep.subr.mxu0 0.0
        %341 = vmatpush1.msra.mxu0 0.0
        %342 = vmatprep.subr.mxu0 0.0
        %343 = vmatpush1.msra.mxu0 0.0
        %344 = vmatprep.subr.mxu0 0.0
        %345 = vmatpush1.msra.mxu0 0.0
        %346 = vmatprep.subr.mxu0 0.0
        %347 = vmatpush1.msra.mxu0 0.0
        %348 = vmatprep.mubr.f32.mxu0 0.0
        %349 = vmatmul.mubr.f32.gmra.mrb[0].mxu0 %v273
        %v350 = vpop.f32.mrb[0].mxu0
        %v351 = vadd.f32 %v254, %v350
        %v352 = vpop.f32.mrb[0].mxu0
        %353 = vmatprep.mubr.f32.mxu0 0.0
        %354 = vmatmul.mubr.f32.gmra.mrb[0].mxu0 %v276
        %v355 = vpop.f32.mrb[0].mxu0
        %v356 = vadd.f32 %v259, %v355
        %v357 = vpop.f32.mrb[0].mxu0
        %358 = vmatprep.mubr.f32.mxu0 0.0
        %359 = vmatmul.mubr.f32.gmra.mrb[0].mxu0 %v279
        %v360 = vpop.f32.mrb[0].mxu0
        %v361 = vadd.f32 %v264, %v360
        %v362 = vpop.f32.mrb[0].mxu0
        %363 = vmatprep.mubr.f32.mxu0 0.0
        %364 = vmatmul.mubr.f32.gmra.mrb[0].mxu0 %v282
        %v365 = vpop.f32.mrb[0].mxu0
        %v366 = vadd.f32 %v269, %v365
        %v367 = vpop.f32.mrb[0].mxu0
        %368 = vdwg.mxu0
        %369 = vst.msk [vmem:[%s139] sm:$0xff] %vm174, %v351
        %370 = vst.msk [vmem:[%s139 + $0x8] sm:$0xff] %vm174, %v356
        %371 = vst.msk [vmem:[%s139 + $0x10] sm:$0xff] %vm174, %v361
        %372 = vst.msk [vmem:[%s139 + $0x18] sm:$0xff] %vm174, %v366
        %s373 = sand.u32 %s71, 1
        %s374 = scalar_lea.sflag [#allocation3], %s373
        %s375 = sand.u32 %s71, 1
        %s376 = smul.addr %s375, 32
        %s377 = scalar_lea.vmem [#allocation2], %s376
        // Predicated region
        $region29: #{mp_forward.1} parent=27 // pred_check
          %p378 = pneg %p81
        $region30: #{mp_forward.1} parent=27 // pred_check_branch
          %380 = sbr.rel (%p378) target = $region32
        $region31: #{mp_forward.1} parent=27 // pred_region
          %s381 = smul.u32 4, %s16
          %s383 = ssub.s32 512, 512
          %384 = vsyncadd %s374, %s383
          %s385 = smul.addr %s381, 128
          %s386 = scalar_lea.hbm %s2, %s385
          %s387 = sshll.u32 %s377, 4
          %s388 = int_to_ptr.vmem [resolvable:$true] %s387
          %393 = dma.vmem_to_hbm [thread:$0]  %s388, 512, %s386, %s374, 128, 128, 8
        $region32: #{mp_forward.1} parent=27 // pred_fallthru
          _
      $region28: #{mp_forward.1} parent=5 // pred_fallthru
        _
      %p394 = scmp.le.s32.totalorder 2, %s11
      // Predicated region
      $region33: #{mp_forward.1} parent=5 // pred_check
        %p395 = pneg %p394
      $region34: #{mp_forward.1} parent=5 // pred_check_branch
        %397 = sbr.rel (%p395) target = $region36
      $region35: #{mp_forward.1} parent=5 // pred_region
        %s398 = ssub.s32 %s11, 2
        // Predicated region
        $region37: #{mp_forward.1} parent=35 // pred_check
          %p399 = pneg %p87
        $region38: #{mp_forward.1} parent=35 // pred_check_branch
          %401 = sbr.rel (%p399) target = $region40
        $region39: #{mp_forward.1} parent=35 // pred_region
          %s402 = sand.u32 %s72, 1
          %s403 = scalar_lea.sflag [#allocation3], %s402
          %s404 = sand.u32 %s72, 1
          %s405 = smul.addr %s404, 32
          %s406 = scalar_lea.vmem [#allocation2], %s405
          %407 = dma.done %s403, 512
        $region40: #{mp_forward.1} parent=35 // pred_fallthru
          _
      $region36: #{mp_forward.1} parent=5 // pred_fallthru
        _
    $region6: #{mp_forward.1} parent=1 // loop_footer
      %s15 = sadd.s32 1, %s11
    $region7: #{mp_forward.1} parent=1 // loop_footer_branch
      %10 = sbr.rel target = $region3
    $region8: #{mp_forward.1} parent=1 // loop_exit
      _
    %408 = vsyncpa [#allocation3], 1
    %s409 = scalar_lea.sflag [#allocation3], 1
    %410 = vsyncpa %s409, 1

</llo_original>
